<compile_context>
chip_gen: v5e
topology: v5e:2x2
jax: 0.10.0
libtpu: 0.0.40
codegen_flags: <defaults>
</compile_context>

<pallas_src>
import functools

import jax
import jax.numpy as jnp
from jax import lax
from jax.experimental import pallas as pl
from jax.experimental.pallas import tpu as pltpu

LANES = 128        # lane width (last dim of every block)
TM_MAX = 2048      # max rows per grid step (1 MiB f32 per input block)
CHUNK_ROWS = 256   # rows per in-kernel accumulation chunk (bounds vreg live ranges)


def _round_up(x, m):
    return ((x + m - 1) // m) * m


def _cdiv(a, b):
    return -(-a // b)


def _num_tensorcores():
    """2 on v7x-class devices (two TensorCores per device), else 1."""
    try:
        kind = jax.devices()[0].device_kind.lower()
    except Exception:
        return 1
    # TODO(synk): if plain "parallel" does not shard across v7x cores, switch
    # the leading axis to pltpu.CORE_PARALLEL (unverifiable off-v7x).
    return 2 if "v7" in kind else 1


def _int_pow(x, gamma):
    """x ** gamma using VPU multiplies when gamma is a small integer."""
    g = float(gamma)
    if g.is_integer() and 0 <= int(g) <= 8:
        gi = int(g)
        if gi == 0:
            return jnp.ones_like(x)
        r = x
        for _ in range(gi - 1):
            r = r * x
        return r
    return x ** g


def _focal_elem(p, t, *, gamma, alpha, eps, logits):
    """Per-element focal loss (shared by kernel and wrapper tail)."""
    p = p.astype(jnp.float32)
    t = t.astype(jnp.float32)
    if logits:
        p = jax.nn.sigmoid(p)
    p = jnp.clip(p, eps, 1.0 - eps)
    return (-alpha * _int_pow(1.0 - p, gamma) * t * jnp.log(p)
            - (1.0 - alpha) * _int_pow(p, gamma) * (1.0 - t)
            * jnp.log(1.0 - p))


def _focal_kernel(out_ref, tgt_ref, part_ref, acc_ref, *,
                  gamma, alpha, eps, logits,
                  rows_full, tm, steps, chunk, need_mask):
    c = pl.program_id(0)
    i = pl.program_id(1)

    @pl.when(i == 0)
    def _():
        acc_ref[...] = jnp.zeros_like(acc_ref)

    n_chunks = tm // chunk
    # Nominal (unclamped) first row of this block; used only for masking.
    row0 = (c * steps + i) * tm

    def chunk_partial(j, masked):
        start = j * chunk
        if not isinstance(start, int):
            start = pl.multiple_of(start, chunk)
        p = out_ref[pl.ds(start, chunk), :]
        t = tgt_ref[pl.ds(start, chunk), :]
        loss = _focal_elem(p, t, gamma=gamma, alpha=alpha, eps=eps,
                           logits=logits)
        if masked:
            # Row-granular padding mask (garbage rows from boundary-block
            # reads -> 0).  Must stay a select (jnp.where), never a multiply:
            # garbage may be NaN/Inf.
            rows = lax.broadcasted_iota(jnp.int32, loss.shape, 0)
            grow = row0 + j * chunk + rows
            loss = jnp.where(grow < rows_full, loss, 0.0)
        # Fold rows in groups of 8 (pure sublane-aligned VPU adds).
        return loss.reshape(chunk // 8, 8, LANES).sum(axis=0)

    def accumulate(masked):
        if n_chunks == 1:
            acc_ref[...] += chunk_partial(0, masked)
        else:
            def body(j, carry):
                acc_ref[...] += chunk_partial(j, masked)
                return carry
            lax.fori_loop(0, n_chunks, body, 0, unroll=True)

    if need_mask:
        fits = row0 + tm <= rows_full

        @pl.when(fits)
        def _():
            accumulate(False)          # clean streaming path

        @pl.when(jnp.logical_not(fits))
        def _():
            accumulate(True)           # boundary / duplicate blocks only
    else:
        accumulate(False)

    @pl.when(i == pl.num_programs(1) - 1)
    def _():
        part_ref[...] = acc_ref[...]


def binary_focal_loss(outputs, targets, logits=False,
                      gamma=2, alpha=0.8, eps=1e-07):
    """Pallas implementation of BinaryFocalLoss.forward (returns scalar mean)."""
    assert outputs.shape == targets.shape
    n = int(outputs.size)
    assert n > 0

    o_flat = outputs.reshape(-1)
    t_flat = targets.reshape(-1)

    rows_full = n // LANES
    tail = n - rows_full * LANES

    total = jnp.float32(0.0)

    if rows_full > 0:
        nsplit = _num_tensorcores()
        rows_per_split = _cdiv(rows_full, nsplit)

        if rows_per_split <= CHUNK_ROWS:
            tm = _round_up(rows_per_split, 16)
            chunk = tm
        else:
            tm = min(TM_MAX, _round_up(rows_per_split, CHUNK_ROWS))
            chunk = CHUNK_ROWS
        assert tm % chunk == 0
        steps = _cdiv(rows_per_split, tm)
        nblk = _cdiv(rows_full, tm)                 # blocks that hold data
        need_mask = (nsplit * steps * tm != rows_full)

        # Reshape of the 128-divisible prefix (identity slice when tail == 0,
        # so no extra HBM traffic for 128-divisible inputs).
        o2 = o_flat[:rows_full * LANES].reshape(rows_full, LANES)
        t2 = t_flat[:rows_full * LANES].reshape(rows_full, LANES)

        kernel = functools.partial(
            _focal_kernel, gamma=float(gamma), alpha=float(alpha),
            eps=float(eps), logits=bool(logits),
            rows_full=rows_full, tm=tm, steps=steps, chunk=chunk,
            need_mask=need_mask)

        def in_map(c, i):
            # Clamp so no block starts past the data; any duplicate read is
            # fully zeroed by the in-kernel row mask.
            return (jnp.minimum(c * steps + i, nblk - 1), 0)

        covered = nsplit * steps * tm * LANES       # elements actually DMA'd
        n_trans = covered * (2 + (1 if logits else 0)
                             + (0 if float(gamma).is_integer() else 4))
        cost = pl.CostEstimate(
            flops=12 * covered,
            transcendentals=n_trans,
            bytes_accessed=covered * (o2.dtype.itemsize + t2.dtype.itemsize)
            + nsplit * 8 * LANES * 4)

        partials = pl.pallas_call(
            kernel,
            out_shape=jax.ShapeDtypeStruct((nsplit * 8, LANES), jnp.float32),
            grid_spec=pltpu.PrefetchScalarGridSpec(
                num_scalar_prefetch=0,
                grid=(nsplit, steps),
                in_specs=[
                    pl.BlockSpec((tm, LANES), in_map),
                    pl.BlockSpec((tm, LANES), in_map),
                ],
                out_specs=pl.BlockSpec((8, LANES), lambda c, i: (c, 0)),
                scratch_shapes=[pltpu.VMEM((8, LANES), jnp.float32)],
            ),
            compiler_params=pltpu.CompilerParams(
                dimension_semantics=("parallel", "arbitrary")),
            cost_estimate=cost,
        )(o2, t2)

        total = total + jnp.sum(partials)

    if tail:
        # <128 leftover elements: trivial wrapper-side expression.
        o_tail = o_flat[rows_full * LANES:]
        t_tail = t_flat[rows_full * LANES:]
        total = total + jnp.sum(_focal_elem(
            o_tail, t_tail, gamma=float(gamma), alpha=float(alpha),
            eps=float(eps), logits=bool(logits)))

    return total / jnp.float32(n)


def _reference(outputs, targets, logits=False, gamma=2, alpha=0.8, eps=1e-07):
    p = outputs.astype(jnp.float32)
    if logits:
        p = jax.nn.sigmoid(p)
    p = jnp.clip(p, eps, 1.0 - eps)
    t = targets.astype(jnp.float32)
    loss = (-alpha * (1.0 - p) ** gamma * t * jnp.log(p)
            - (1.0 - alpha) * p ** gamma * (1.0 - t) * jnp.log(1.0 - p))
    return loss.mean()


def _check(o, t, logits, rtol, atol):
    got = jax.block_until_ready(binary_focal_loss(o, t, logits=logits))
    ref = _reference(o, t, logits=logits)
    assert jnp.allclose(got, ref, rtol=rtol, atol=atol), (got, ref)


if __name__ == "__main__":
    key = jax.random.PRNGKey(0)
    k1, k2 = jax.random.split(key)

    # Small segmentation-style shape: (B, C, H, W).
    shape = (2, 4, 16, 16)
    outputs = jax.random.uniform(k1, shape, dtype=jnp.float32)
    targets = (jax.random.uniform(k2, shape, dtype=jnp.float32) > 0.5
               ).astype(jnp.float32)
    _check(outputs, targets, False, 1e-5, 1e-7)

    # logits=True branch.
    logits_in = jax.random.normal(k1, shape, dtype=jnp.float32)
    _check(logits_in, targets, True, 1e-5, 1e-7)

    # Ragged shape: partial boundary block + <128-element tail in wrapper.
    shape3 = (3, 5, 7, 11)
    k3, k4 = jax.random.split(k2)
    o3 = jax.random.uniform(k3, shape3, dtype=jnp.float32)
    t3 = (jax.random.uniform(k4, shape3, dtype=jnp.float32) > 0.5
          ).astype(jnp.float32)
    _check(o3, t3, False, 1e-5, 1e-7)

    # Multi-step with an over-running last block (gated row mask path).
    shape4 = (2, 4, 256, 200)
    k5, k6 = jax.random.split(k4)
    o4 = jax.random.uniform(k5, shape4, dtype=jnp.float32)
    t4 = (jax.random.uniform(k6, shape4, dtype=jnp.float32) > 0.5
          ).astype(jnp.float32)
    _check(o4, t4, False, 1e-4, 1e-7)

    # Multi-step, mask-free streaming path with chunked (fori_loop) fold.
    shape5 = (1, 4, 512, 640)
    k7, k8 = jax.random.split(k6)
    o5 = jax.random.uniform(k7, shape5, dtype=jnp.float32)
    t5 = (jax.random.uniform(k8, shape5, dtype=jnp.float32) > 0.5
          ).astype(jnp.float32)
    _check(o5, t5, True, 1e-4, 1e-7)

    print("KERNEL_OK")
</pallas_src>

<mosaic_0001>
module attributes {stable_mosaic.version = 11 : i64} {
  func.func @_focal_kernel(%arg0: i32, %arg1: i32, %arg2: memref<16x128xf32, #tpu.memory_space<vmem>>, %arg3: memref<16x128xf32, #tpu.memory_space<vmem>>, %arg4: memref<8x128xf32, #tpu.memory_space<vmem>>, %arg5: memref<8x128xf32, #tpu.memory_space<vmem>>) attributes {dimension_semantics = [#tpu.dimension_semantics<parallel>, #tpu.dimension_semantics<arbitrary>], iteration_bounds = array<i64: 1, 1>, scalar_prefetch = 0 : i64, scratch_operands = 1 : i64, tpu.core_type = #tpu.core_type<tc>, window_params = [{transform_indices = @transform_0, window_bounds = array<i64: 16, 128>}, {transform_indices = @transform_1, window_bounds = array<i64: 16, 128>}, {transform_indices = @transform_2, window_bounds = array<i64: 8, 128>}]} {
    %c0_i32 = arith.constant 0 : i32
    %0 = arith.cmpi eq, %arg1, %c0_i32 : i32
    %1 = arith.extui %0 : i1 to i32
    %c0_i32_0 = arith.constant 0 : i32
    %2 = arith.cmpi ne, %1, %c0_i32_0 : i32
    scf.if %2 {
      %cst_17 = arith.constant 0.000000e+00 : f32
      %36 = vector.broadcast %cst_17 : f32 to vector<8x128xf32>
      %c0_18 = arith.constant 0 : index
      %c0_19 = arith.constant 0 : index
      %37 = vector.load %arg5[%c0_18, %c0_19] : memref<8x128xf32, #tpu.memory_space<vmem>>, vector<8x128xf32>
      tpu.vector_store %arg5[%c0_18, %c0_19], %36 {strides = array<i32>} : memref<8x128xf32, #tpu.memory_space<vmem>>, vector<8x128xf32>,
    } else {
    }
    %c0 = arith.constant 0 : index
    %c0_1 = arith.constant 0 : index
    %3 = vector.load %arg5[%c0, %c0_1] : memref<8x128xf32, #tpu.memory_space<vmem>>, vector<8x128xf32>
    %c0_2 = arith.constant 0 : index
    %c0_3 = arith.constant 0 : index
    %4 = vector.load %arg2[%c0_2, %c0_3] : memref<16x128xf32, #tpu.memory_space<vmem>>, vector<16x128xf32>
    %c0_4 = arith.constant 0 : index
    %c0_5 = arith.constant 0 : index
    %5 = vector.load %arg3[%c0_4, %c0_5] : memref<16x128xf32, #tpu.memory_space<vmem>>, vector<16x128xf32>
    %cst = arith.constant 1.000000e-07 : f32
    %cst_6 = arith.constant 0.99999988 : f32
    %6 = vector.broadcast %cst : f32 to vector<16x128xf32>
    %7 = arith.maximumf %6, %4 : vector<16x128xf32>
    %8 = vector.broadcast %cst_6 : f32 to vector<16x128xf32>
    %9 = arith.minimumf %8, %7 : vector<16x128xf32>
    %cst_7 = arith.constant 1.000000e+00 : f32
    %10 = vector.broadcast %cst_7 : f32 to vector<16x128xf32>
    %11 = arith.subf %10, %9 : vector<16x128xf32>
    %12 = arith.mulf %11, %11 : vector<16x128xf32>
    %cst_8 = arith.constant -8.000000e-01 : f32
    %13 = vector.broadcast %cst_8 : f32 to vector<16x128xf32>
    %14 = arith.mulf %13, %12 : vector<16x128xf32>
    %15 = arith.mulf %14, %5 : vector<16x128xf32>
    %16 = math.log %9 : vector<16x128xf32>
    %17 = arith.mulf %15, %16 : vector<16x128xf32>
    %18 = arith.mulf %9, %9 : vector<16x128xf32>
    %cst_9 = arith.constant 2.000000e-01 : f32
    %19 = vector.broadcast %cst_9 : f32 to vector<16x128xf32>
    %20 = arith.mulf %19, %18 : vector<16x128xf32>
    %cst_10 = arith.constant 1.000000e+00 : f32
    %21 = vector.broadcast %cst_10 : f32 to vector<16x128xf32>
    %22 = arith.subf %21, %5 : vector<16x128xf32>
    %23 = arith.mulf %20, %22 : vector<16x128xf32>
    %cst_11 = arith.constant 1.000000e+00 : f32
    %24 = vector.broadcast %cst_11 : f32 to vector<16x128xf32>
    %25 = arith.subf %24, %9 : vector<16x128xf32>
    %26 = math.log %25 : vector<16x128xf32>
    %27 = arith.mulf %23, %26 : vector<16x128xf32>
    %28 = arith.subf %17, %27 : vector<16x128xf32>
    %29 = vector.shape_cast %28 : vector<16x128xf32> to vector<2x8x128xf32>
    %cst_12 = arith.constant dense<0.000000e+00> : vector<8x128xf32>
    %30 = vector.multi_reduction <add>, %29, %cst_12 [0] : vector<2x8x128xf32> to vector<8x128xf32>
    %31 = arith.addf %3, %30 : vector<8x128xf32>
    %c0_13 = arith.constant 0 : index
    %c0_14 = arith.constant 0 : index
    %32 = vector.load %arg5[%c0_13, %c0_14] : memref<8x128xf32, #tpu.memory_space<vmem>>, vector<8x128xf32>
    tpu.vector_store %arg5[%c0_13, %c0_14], %31 {strides = array<i32>} : memref<8x128xf32, #tpu.memory_space<vmem>>, vector<8x128xf32>,
    %c0_i32_15 = arith.constant 0 : i32
    %33 = arith.cmpi eq, %arg1, %c0_i32_15 : i32
    %34 = arith.extui %33 : i1 to i32
    %c0_i32_16 = arith.constant 0 : i32
    %35 = arith.cmpi ne, %34, %c0_i32_16 : i32
    scf.if %35 {
      %c0_17 = arith.constant 0 : index
      %c0_18 = arith.constant 0 : index
      %36 = vector.load %arg5[%c0_17, %c0_18] : memref<8x128xf32, #tpu.memory_space<vmem>>, vector<8x128xf32>
      %c0_19 = arith.constant 0 : index
      %c0_20 = arith.constant 0 : index
      %37 = vector.load %arg4[%c0_19, %c0_20] : memref<8x128xf32, #tpu.memory_space<vmem>>, vector<8x128xf32>
      tpu.vector_store %arg4[%c0_19, %c0_20], %36 {strides = array<i32>} : memref<8x128xf32, #tpu.memory_space<vmem>>, vector<8x128xf32>,
    } else {
    }
    return
  }
  func.func @transform_0(%arg0: i32, %arg1: i32) -> (i32, i32) {
    %c1_i32 = arith.constant 1 : i32
    %0 = arith.muli %arg0, %c1_i32 : i32
    %1 = arith.addi %0, %arg1 : i32
    %c0_i32 = arith.constant 0 : i32
    %2 = arith.minsi %1, %c0_i32 : i32
    %c0_i32_0 = arith.constant 0 : i32
    %c0_i32_1 = arith.constant 0 : i32
    return %2, %c0_i32_0 : i32, i32
  }
  func.func @transform_1(%arg0: i32, %arg1: i32) -> (i32, i32) {
    %c1_i32 = arith.constant 1 : i32
    %0 = arith.muli %arg0, %c1_i32 : i32
    %1 = arith.addi %0, %arg1 : i32
    %c0_i32 = arith.constant 0 : i32
    %2 = arith.minsi %1, %c0_i32 : i32
    %c0_i32_0 = arith.constant 0 : i32
    %c0_i32_1 = arith.constant 0 : i32
    return %2, %c0_i32_0 : i32, i32
  }
  func.func @transform_2(%arg0: i32, %arg1: i32) -> (i32, i32) {
    %c0_i32 = arith.constant 0 : i32
    %c0_i32_0 = arith.constant 0 : i32
    return %arg0, %c0_i32 : i32, i32
  }
}

</mosaic_0001>

<llo_original>
// kernel: tpu_custom_call.1
$region0: #{tpu_custom_call.1}
  #allocation0 [shape = 'u32[]', space=smem, size = 0x4, offset = 0x4, fixed_abs, tag = 'smem constant byte address 0x4 - core index']
  #allocation1 [shape = 'u32[72,128]{1,0:T(1,128)}', space=vmem, size = 0x9000, scoped, tag = 'internal scratch']
  #allocation2 [shape = 'f32[8,128]{1,0:T(8,128)}', space=vmem, size = 0x1000, scoped, tag = 'scratch operand']
  %s0 = inlined_call_operand.hbm [shape: f32[16,128], index: 0, kind: input, shape index: {}]
  %s1 = inlined_call_operand.hbm [shape: f32[16,128], index: 1, kind: input, shape index: {}]
  %s2 = inlined_call_operand.hbm [shape: f32[8,128], index: 2, kind: output, shape index: {}]
  %s3 = sld [smem:[#allocation0]]
  $region34: #{tpu_custom_call.1} parent=0
    _
  %s5 = ssub.s32 1, %s3
  %s6 = scalar_select 0, %s5, %s3
  $region1: #{tpu_custom_call.1} parent=0
    #allocation3 [shape = 'u8[8192]{0}', space=vmem, size = 0x2000, scoped, tag = 'input window, operand 0, single buffered']
    #allocation4 [shape = 's32[1]{0}', space=sflag, size = 0x4, scoped, tag = 'scoped memory for tpu_custom_call.1']
    #allocation5 [shape = 's32[1]{0}', space=sflag, size = 0x4, scoped, tag = 'scoped memory for tpu_custom_call.1']
    #allocation6 [shape = 'u8[8192]{0}', space=vmem, size = 0x2000, scoped, tag = 'input window, operand 1, single buffered']
    #allocation7 [shape = 's32[1]{0}', space=sflag, size = 0x4, scoped, tag = 'scoped memory for tpu_custom_call.1']
    #allocation8 [shape = 'u8[4096]{0}', space=vmem, size = 0x1000, scoped, tag = 'output window, operand 0, single buffered']
    %7 = vsyncpa [#allocation4], 0
    %8 = vsyncpa [#allocation7], 0
    %9 = vsyncpa [#allocation5], 0
    // Predicated region
    $region2: #{tpu_custom_call.1} parent=1 // pred_check
      _
    $region3: #{tpu_custom_call.1} parent=1 // pred_check_branch
      %11 = sbr.rel (0) target = $region5
    $region4: #{tpu_custom_call.1} parent=1 // pred_region
      %s12 = sadd.s32 0, 0
      %p13 = scmp.lt.s32.totalorder %s12, 0
      %s14 = scalar_select %p13, %s12, 0
      %s15 = smul.u32 2, %s14
      %17 = vsyncadd [#allocation4], 0
      %s18 = smul.addr %s15, 8
      %s19 = scalar_lea.hbm %s0, %s18
      %s20 = sshll.u32 %s19, 4
      %s21 = int_to_ptr.hbm [resolvable:$true] %s20
      %s22 = sshll.u32 [#allocation3], 4
      %s23 = int_to_ptr.vmem [resolvable:$true] %s22
      %28 = dma.hbm_to_vmem [thread:$0]  %s21, 256, %s23, [#allocation4], 128, 128, 8
    $region5: #{tpu_custom_call.1} parent=1 // pred_fallthru
      _
    // Predicated region
    $region6: #{tpu_custom_call.1} parent=1 // pred_check
      _
    $region7: #{tpu_custom_call.1} parent=1 // pred_check_branch
      %30 = sbr.rel (0) target = $region9
    $region8: #{tpu_custom_call.1} parent=1 // pred_region
      %s31 = sadd.s32 0, 0
      %p32 = scmp.lt.s32.totalorder %s31, 0
      %s33 = scalar_select %p32, %s31, 0
      %s34 = smul.u32 2, %s33
      %36 = vsyncadd [#allocation7], 0
      %s37 = smul.addr %s34, 8
      %s38 = scalar_lea.hbm %s1, %s37
      %s39 = sshll.u32 %s38, 4
      %s40 = int_to_ptr.hbm [resolvable:$true] %s39
      %s41 = sshll.u32 [#allocation6], 4
      %s42 = int_to_ptr.vmem [resolvable:$true] %s41
      %47 = dma.hbm_to_vmem [thread:$0]  %s40, 256, %s42, [#allocation7], 128, 128, 8
    $region9: #{tpu_custom_call.1} parent=1 // pred_fallthru
      _
    // Predicated region
    $region10: #{tpu_custom_call.1} parent=1 // pred_check
      _
    $region11: #{tpu_custom_call.1} parent=1 // pred_check_branch
      %49 = sbr.rel (0) target = $region13
    $region12: #{tpu_custom_call.1} parent=1 // pred_region
      %51 = dma.done [#allocation4], 256
    $region13: #{tpu_custom_call.1} parent=1 // pred_fallthru
      _
    // Predicated region
    $region14: #{tpu_custom_call.1} parent=1 // pred_check
      _
    $region15: #{tpu_custom_call.1} parent=1 // pred_check_branch
      %53 = sbr.rel (0) target = $region17
    $region16: #{tpu_custom_call.1} parent=1 // pred_region
      %55 = dma.done [#allocation7], 256
    $region17: #{tpu_custom_call.1} parent=1 // pred_fallthru
      _
    %s56 = sadd.s32 0, 0
    %p57 = scmp.lt.s32.totalorder %s56, 0
    %s58 = scalar_select %p57, %s56, 0
    %s59 = smul.u32 2, %s58
    %s60 = sadd.s32 0, 0
    %p61 = scmp.lt.s32.totalorder %s60, 0
    %s62 = scalar_select %p61, %s60, 0
    %s63 = smul.u32 2, %s62
    %p64 = scmp.eq.s32.totalorder 0, 0
    // Predicated region
    $region18: #{tpu_custom_call.1} parent=1 // pred_check
      %p65 = pneg %p64
    $region19: #{tpu_custom_call.1} parent=1 // pred_check_branch
      %67 = sbr.rel (%p65) target = $region21
    $region20: #{tpu_custom_call.1} parent=1 // pred_region
      %68 = vst [vmem:[#allocation2] sm:$0xff] 0.0
    $region21: #{tpu_custom_call.1} parent=1 // pred_fallthru
      _
    %v69 = vld [vmem:[#allocation2] sm:$0xff]
    %v70 = vld [vmem:[#allocation3] sm:$0xff]
    %v71 = vld [vmem:[#allocation3 + $0x8] sm:$0xff]
    %v72 = vld [vmem:[#allocation6] sm:$0xff]
    %v73 = vld [vmem:[#allocation6 + $0x8] sm:$0xff]
    %v74 = vmax.f32 %v70, 1e-07
    %v75 = vmax.f32 %v71, 1e-07
    %v76 = vmin.f32 %v74, 0.9999999
    %v77 = vmin.f32 %v75, 0.9999999
    %v78 = vsub.f32 1.0, %v76
    %v79 = vsub.f32 1.0, %v77
    %v80 = vmul.f32 %v78, %v78
    %v81 = vmul.f32 %v79, %v79
    %v82 = vmul.f32 %v80, -0.8
    %v83 = vmul.f32 %v81, -0.8
    %v84 = vmul.f32 %v82, %v72
    %v85 = vmul.f32 %v83, %v73
    %v86 = vlog2.pop %v76
    %v87 = vmul.f32 %v86, 0.6931472
    %v88 = vlog2.pop %v77
    %v89 = vmul.f32 %v88, 0.6931472
    %v90 = vmul.f32 %v84, %v87
    %v91 = vmul.f32 %v85, %v89
    %v92 = vmul.f32 %v76, %v76
    %v93 = vmul.f32 %v77, %v77
    %v94 = vmul.f32 %v92, 0.2
    %v95 = vmul.f32 %v93, 0.2
    %v96 = vsub.f32 1.0, %v72
    %v97 = vsub.f32 1.0, %v73
    %v98 = vmul.f32 %v94, %v96
    %v99 = vmul.f32 %v95, %v97
    %v100 = vlog2.pop %v78
    %v101 = vmul.f32 %v100, 0.6931472
    %v102 = vlog2.pop %v79
    %v103 = vmul.f32 %v102, 0.6931472
    %v104 = vmul.f32 %v98, %v101
    %v105 = vmul.f32 %v99, %v103
    %v106 = vsub.f32 %v90, %v104
    %v107 = vsub.f32 %v91, %v105
    %v108 = vadd.f32 %v106, %v107
    %v109 = vadd.f32 %v69, %v108
    %110 = vst [vmem:[#allocation2] sm:$0xff] %v109
    // Predicated region
    $region22: #{tpu_custom_call.1} parent=1 // pred_check
      %p111 = pneg %p64
    $region23: #{tpu_custom_call.1} parent=1 // pred_check_branch
      %113 = sbr.rel (%p111) target = $region25
    $region24: #{tpu_custom_call.1} parent=1 // pred_region
      %v114 = vld [vmem:[#allocation2] sm:$0xff]
      %115 = vst [vmem:[#allocation8] sm:$0xff] %v114
    $region25: #{tpu_custom_call.1} parent=1 // pred_fallthru
      _
    // Predicated region
    $region26: #{tpu_custom_call.1} parent=1 // pred_check
      _
    $region27: #{tpu_custom_call.1} parent=1 // pred_check_branch
      %117 = sbr.rel (0) target = $region29
    $region28: #{tpu_custom_call.1} parent=1 // pred_region
      %119 = vsyncadd [#allocation5], 0
      %s121 = sshll.u32 [#allocation8], 4
      %s122 = int_to_ptr.vmem [resolvable:$true] %s121
      %s123 = sshll.u32 %s2, 4
      %s124 = int_to_ptr.hbm [resolvable:$true] %s123
      %126 = dma.vmem_to_hbm [thread:$0]  %s122, 128, %s124, [#allocation5]
    $region29: #{tpu_custom_call.1} parent=1 // pred_fallthru
      _
    // Predicated region
    $region30: #{tpu_custom_call.1} parent=1 // pred_check
      _
    $region31: #{tpu_custom_call.1} parent=1 // pred_check_branch
      %128 = sbr.rel (0) target = $region33
    $region32: #{tpu_custom_call.1} parent=1 // pred_region
      %130 = dma.done [#allocation5], 128
    $region33: #{tpu_custom_call.1} parent=1 // pred_fallthru
      _
    %131 = vsyncpa [#allocation4], 1
    %132 = vsyncpa [#allocation7], 1
    %133 = vsyncpa [#allocation5], 1

</llo_original>
